<compile_context>
chip_gen: v6e
topology: v6e:2x2x1
jax: 0.10.0
libtpu: 0.0.40
codegen_flags: <defaults>
</compile_context>

<pallas_src>
import jax
import jax.numpy as jnp
from jax.experimental import pallas as pl
from jax.experimental.pallas import tpu as pltpu


def mlp_kernel(x_ref, w1_ref, b1_ref, w2_ref, b2_ref, w3_ref, b3_ref, o_ref):
    # Layer 1: Linear(n_in_p, 512) + (dropout = identity) + ReLU
    # bf16 operands feed the MXU at full rate; accumulation stays fp32.
    h = jnp.dot(x_ref[...].astype(jnp.bfloat16), w1_ref[...],
                preferred_element_type=jnp.float32)
    h = jnp.maximum(h + b1_ref[...], 0.0)          # bias (1,512) broadcasts; fp32 VPU

    # Hidden layer: Linear(512, 512) + (dropout = identity) + ReLU
    h = jnp.dot(h.astype(jnp.bfloat16), w2_ref[...],
                preferred_element_type=jnp.float32)
    h = jnp.maximum(h + b2_ref[...], 0.0)

    # Output layer: Linear(512, n_out_p)   (n_out_p padded to 128 -> lane-dense stores)
    out = jnp.dot(h.astype(jnp.bfloat16), w3_ref[...],
                  preferred_element_type=jnp.float32)
    o_ref[...] = (out + b3_ref[...]).astype(o_ref.dtype)


def _round_up(x, m):
    return (x + m - 1) // m * m


@jax.jit
def mlp_forward(x, w1, b1, w2, b2, w3, b3):
    """x: [B, n_in] fp32. Weights stored (in, out) = transpose of PyTorch layout."""
    B, d_in = x.shape
    H = w1.shape[1]
    d_out = w3.shape[1]

    # Lane-dense padding of the feature dims; batch tile chosen from the
    # (static at trace time) batch size: small batches -> small tile (no
    # wasted MXU rows), large batches -> 512-row tile to amortize per-step
    # grid overhead.
    d_in_p = _round_up(d_in, 128)
    d_out_p = _round_up(d_out, 128)
    block_b = min(512, _round_up(B, 8))
    Bp = _round_up(B, block_b)

    x_p = jnp.pad(x, ((0, Bp - B), (0, d_in_p - d_in)))
    w1_p = jnp.pad(w1, ((0, d_in_p - d_in), (0, 0))).astype(jnp.bfloat16)
    w2_p = w2.astype(jnp.bfloat16)
    w3_p = jnp.pad(w3, ((0, 0), (0, d_out_p - d_out))).astype(jnp.bfloat16)
    b1_p = b1.reshape(1, H).astype(jnp.float32)
    b2_p = b2.reshape(1, H).astype(jnp.float32)
    b3_p = jnp.pad(b3.reshape(1, d_out),
                   ((0, 0), (0, d_out_p - d_out))).astype(jnp.float32)

    grid = (Bp // block_b,)

    cost = pl.CostEstimate(
        flops=2 * Bp * (d_in_p * H + H * H + H * d_out_p),
        transcendentals=0,
        bytes_accessed=(x_p.size * 4 + Bp * d_out_p * 4
                        + (w1_p.size + w2_p.size + w3_p.size) * 2
                        + (b1_p.size + b2_p.size + b3_p.size) * 4),
    )

    # Weights/biases never change block index -> single-buffer them (saves VMEM,
    # they stay resident across all batch tiles).
    resident = dict(pipeline_mode=pl.Buffered(1))

    out = pl.pallas_call(
        mlp_kernel,
        out_shape=jax.ShapeDtypeStruct((Bp, d_out_p), jnp.float32),
        grid_spec=pltpu.PrefetchScalarGridSpec(
            num_scalar_prefetch=0,
            grid=grid,
            in_specs=[
                pl.BlockSpec((block_b, d_in_p), lambda i: (i, 0)),           # x tile
                pl.BlockSpec((d_in_p, H), lambda i: (0, 0), **resident),     # W1
                pl.BlockSpec((1, H), lambda i: (0, 0), **resident),          # b1
                pl.BlockSpec((H, H), lambda i: (0, 0), **resident),          # W2
                pl.BlockSpec((1, H), lambda i: (0, 0), **resident),          # b2
                pl.BlockSpec((H, d_out_p), lambda i: (0, 0), **resident),    # W3
                pl.BlockSpec((1, d_out_p), lambda i: (0, 0), **resident),    # b3
            ],
            out_specs=pl.BlockSpec((block_b, d_out_p), lambda i: (i, 0)),
        ),
        compiler_params=pltpu.CompilerParams(
            dimension_semantics=("parallel",)),
        cost_estimate=cost,
    )(x_p, w1_p, b1_p, w2_p, b2_p, w3_p, b3_p)

    return out[:B, :d_out]


def init_linear(key, fan_in, fan_out):
    """PyTorch nn.Linear default init: U(-1/sqrt(fan_in), 1/sqrt(fan_in))."""
    kw, kb = jax.random.split(key)
    bound = 1.0 / jnp.sqrt(jnp.float32(fan_in))
    # Stored as (in, out): transpose of PyTorch's (out, in) weight.
    w = jax.random.uniform(kw, (fan_in, fan_out), jnp.float32, -bound, bound)
    b = jax.random.uniform(kb, (1, fan_out), jnp.float32, -bound, bound)
    return w, b


def reference_mlp_bf16(x, w1, b1, w2, b2, w3, b3):
    """Same math as the kernel (bf16 operands, fp32 accumulation)."""
    bf = jnp.bfloat16
    h = jnp.dot(x.astype(bf), w1.astype(bf), preferred_element_type=jnp.float32) + b1
    h = jnp.maximum(h, 0.0)
    h = jnp.dot(h.astype(bf), w2.astype(bf), preferred_element_type=jnp.float32) + b2
    h = jnp.maximum(h, 0.0)
    return jnp.dot(h.astype(bf), w3.astype(bf), preferred_element_type=jnp.float32) + b3


def reference_mlp_f32(x, w1, b1, w2, b2, w3, b3):
    h = jnp.maximum(x @ w1 + b1, 0.0)
    h = jnp.maximum(h @ w2 + b2, 0.0)
    return h @ w3 + b3


if __name__ == "__main__":
    n_inputs, hidden, n_outputs = 32, 512, 16
    batch = 16

    key = jax.random.PRNGKey(0)
    k_x, k1, k2, k3 = jax.random.split(key, 4)

    x = jax.random.normal(k_x, (batch, n_inputs), jnp.float32)
    w1, b1 = init_linear(k1, n_inputs, hidden)   # self.input
    w2, b2 = init_linear(k2, hidden, hidden)     # self.hiddens[0]
    w3, b3 = init_linear(k3, hidden, n_outputs)  # self.output

    out = mlp_forward(x, w1, b1, w2, b2, w3, b3)
    out = jax.block_until_ready(out)
    assert out.shape == (batch, n_outputs)

    # Tight check vs. a reference doing the same bf16-operand math.
    ref_bf16 = reference_mlp_bf16(x, w1, b1, w2, b2, w3, b3)
    assert jnp.allclose(out, ref_bf16, atol=1e-3, rtol=1e-3)

    # Loose check vs. the full-fp32 PyTorch semantics.
    ref_f32 = reference_mlp_f32(x, w1, b1, w2, b2, w3, b3)
    assert jnp.allclose(out, ref_f32, atol=5e-2, rtol=5e-2)

    print("KERNEL_OK")
</pallas_src>

<mosaic_0001>
module attributes {stable_mosaic.version = 11 : i64} {
  func.func @mlp_kernel(%arg0: i32, %arg1: memref<16x128xf32, #tpu.memory_space<vmem>>, %arg2: memref<128x512xbf16, #tpu.memory_space<vmem>>, %arg3: memref<1x512xf32, #tpu.memory_space<vmem>>, %arg4: memref<512x512xbf16, #tpu.memory_space<vmem>>, %arg5: memref<1x512xf32, #tpu.memory_space<vmem>>, %arg6: memref<512x128xbf16, #tpu.memory_space<vmem>>, %arg7: memref<1x128xf32, #tpu.memory_space<vmem>>, %arg8: memref<16x128xf32, #tpu.memory_space<vmem>>) attributes {dimension_semantics = [#tpu.dimension_semantics<parallel>], iteration_bounds = array<i64: 1>, scalar_prefetch = 0 : i64, scratch_operands = 0 : i64, tpu.core_type = #tpu.core_type<tc>, window_params = [{transform_indices = @transform_0, window_bounds = array<i64: 16, 128>}, {pipeline_mode = #tpu.pipeline_mode<synchronous>, transform_indices = @transform_1, window_bounds = array<i64: 128, 512>}, {pipeline_mode = #tpu.pipeline_mode<synchronous>, transform_indices = @transform_2, window_bounds = array<i64: 1, 512>}, {pipeline_mode = #tpu.pipeline_mode<synchronous>, transform_indices = @transform_3, window_bounds = array<i64: 512, 512>}, {pipeline_mode = #tpu.pipeline_mode<synchronous>, transform_indices = @transform_4, window_bounds = array<i64: 1, 512>}, {pipeline_mode = #tpu.pipeline_mode<synchronous>, transform_indices = @transform_5, window_bounds = array<i64: 512, 128>}, {pipeline_mode = #tpu.pipeline_mode<synchronous>, transform_indices = @transform_6, window_bounds = array<i64: 1, 128>}, {transform_indices = @transform_7, window_bounds = array<i64: 16, 128>}]} {
    %c0 = arith.constant 0 : index
    %c0_0 = arith.constant 0 : index
    %0 = vector.load %arg1[%c0, %c0_0] : memref<16x128xf32, #tpu.memory_space<vmem>>, vector<16x128xf32>
    %1 = arith.truncf %0 : vector<16x128xf32> to vector<16x128xbf16>
    %c0_1 = arith.constant 0 : index
    %c0_2 = arith.constant 0 : index
    %2 = vector.load %arg2[%c0_1, %c0_2] : memref<128x512xbf16, #tpu.memory_space<vmem>>, vector<128x512xbf16>
    %cst = arith.constant dense<0.000000e+00> : vector<16x512xf32>
    %3 = tpu.matmul %1, %2, %cst {dimension_numbers = #tpu.dot_dimension_numbers<[1], [0], [0], [1], [0, 0, 1, 1], [], []>} : vector<16x128xbf16>, vector<128x512xbf16>, vector<16x512xf32> -> vector<16x512xf32>
    %c0_3 = arith.constant 0 : index
    %c0_4 = arith.constant 0 : index
    %4 = vector.load %arg3[%c0_3, %c0_4] : memref<1x512xf32, #tpu.memory_space<vmem>>, vector<1x512xf32>
    %5 = vector.broadcast %4 : vector<1x512xf32> to vector<16x512xf32>
    %6 = arith.addf %3, %5 : vector<16x512xf32>
    %cst_5 = arith.constant 0.000000e+00 : f32
    %7 = vector.broadcast %cst_5 : f32 to vector<16x512xf32>
    %8 = arith.maximumf %6, %7 : vector<16x512xf32>
    %9 = arith.truncf %8 : vector<16x512xf32> to vector<16x512xbf16>
    %c0_6 = arith.constant 0 : index
    %c0_7 = arith.constant 0 : index
    %10 = vector.load %arg4[%c0_6, %c0_7] : memref<512x512xbf16, #tpu.memory_space<vmem>>, vector<512x512xbf16>
    %cst_8 = arith.constant dense<0.000000e+00> : vector<16x512xf32>
    %11 = tpu.matmul %9, %10, %cst_8 {dimension_numbers = #tpu.dot_dimension_numbers<[1], [0], [0], [1], [0, 0, 1, 1], [], []>} : vector<16x512xbf16>, vector<512x512xbf16>, vector<16x512xf32> -> vector<16x512xf32>
    %c0_9 = arith.constant 0 : index
    %c0_10 = arith.constant 0 : index
    %12 = vector.load %arg5[%c0_9, %c0_10] : memref<1x512xf32, #tpu.memory_space<vmem>>, vector<1x512xf32>
    %13 = vector.broadcast %12 : vector<1x512xf32> to vector<16x512xf32>
    %14 = arith.addf %11, %13 : vector<16x512xf32>
    %cst_11 = arith.constant 0.000000e+00 : f32
    %15 = vector.broadcast %cst_11 : f32 to vector<16x512xf32>
    %16 = arith.maximumf %14, %15 : vector<16x512xf32>
    %17 = arith.truncf %16 : vector<16x512xf32> to vector<16x512xbf16>
    %c0_12 = arith.constant 0 : index
    %c0_13 = arith.constant 0 : index
    %18 = vector.load %arg6[%c0_12, %c0_13] : memref<512x128xbf16, #tpu.memory_space<vmem>>, vector<512x128xbf16>
    %cst_14 = arith.constant dense<0.000000e+00> : vector<16x128xf32>
    %19 = tpu.matmul %17, %18, %cst_14 {dimension_numbers = #tpu.dot_dimension_numbers<[1], [0], [0], [1], [0, 0, 1, 1], [], []>} : vector<16x512xbf16>, vector<512x128xbf16>, vector<16x128xf32> -> vector<16x128xf32>
    %c0_15 = arith.constant 0 : index
    %c0_16 = arith.constant 0 : index
    %20 = vector.load %arg7[%c0_15, %c0_16] : memref<1x128xf32, #tpu.memory_space<vmem>>, vector<1x128xf32>
    %21 = vector.broadcast %20 : vector<1x128xf32> to vector<16x128xf32>
    %22 = arith.addf %19, %21 : vector<16x128xf32>
    %c0_17 = arith.constant 0 : index
    %c0_18 = arith.constant 0 : index
    %23 = vector.load %arg8[%c0_17, %c0_18] : memref<16x128xf32, #tpu.memory_space<vmem>>, vector<16x128xf32>
    tpu.vector_store %arg8[%c0_17, %c0_18], %22 {strides = array<i32>} : memref<16x128xf32, #tpu.memory_space<vmem>>, vector<16x128xf32>,
    return
  }
  func.func @transform_0(%arg0: i32) -> (i32, i32) {
    %c0_i32 = arith.constant 0 : i32
    %c0_i32_0 = arith.constant 0 : i32
    return %arg0, %c0_i32 : i32, i32
  }
  func.func @transform_1(%arg0: i32) -> (i32, i32) {
    %c0_i32 = arith.constant 0 : i32
    %c0_i32_0 = arith.constant 0 : i32
    %c0_i32_1 = arith.constant 0 : i32
    return %c0_i32, %c0_i32_0 : i32, i32
  }
  func.func @transform_2(%arg0: i32) -> (i32, i32) {
    %c0_i32 = arith.constant 0 : i32
    %c0_i32_0 = arith.constant 0 : i32
    %c0_i32_1 = arith.constant 0 : i32
    return %c0_i32, %c0_i32_0 : i32, i32
  }
  func.func @transform_3(%arg0: i32) -> (i32, i32) {
    %c0_i32 = arith.constant 0 : i32
    %c0_i32_0 = arith.constant 0 : i32
    %c0_i32_1 = arith.constant 0 : i32
    return %c0_i32, %c0_i32_0 : i32, i32
  }
  func.func @transform_4(%arg0: i32) -> (i32, i32) {
    %c0_i32 = arith.constant 0 : i32
    %c0_i32_0 = arith.constant 0 : i32
    %c0_i32_1 = arith.constant 0 : i32
    return %c0_i32, %c0_i32_0 : i32, i32
  }
  func.func @transform_5(%arg0: i32) -> (i32, i32) {
    %c0_i32 = arith.constant 0 : i32
    %c0_i32_0 = arith.constant 0 : i32
    %c0_i32_1 = arith.constant 0 : i32
    return %c0_i32, %c0_i32_0 : i32, i32
  }
  func.func @transform_6(%arg0: i32) -> (i32, i32) {
    %c0_i32 = arith.constant 0 : i32
    %c0_i32_0 = arith.constant 0 : i32
    %c0_i32_1 = arith.constant 0 : i32
    return %c0_i32, %c0_i32_0 : i32, i32
  }
  func.func @transform_7(%arg0: i32) -> (i32, i32) {
    %c0_i32 = arith.constant 0 : i32
    %c0_i32_0 = arith.constant 0 : i32
    return %arg0, %c0_i32 : i32, i32
  }
}

</mosaic_0001>

<llo_original>
// kernel: mlp_forward.1
$region0: #{mlp_forward.1}
  #allocation0 [shape = 'u32[]', space=smem, size = 0x4, offset = 0x4, fixed_abs, tag = 'smem constant byte address 0x4 - core index']
  #allocation1 [shape = 'u32[144,128]{1,0:T(1,128)}', space=vmem, size = 0x12000, scoped, tag = 'internal scratch']
  %s0 = inlined_call_operand.vmem [shape: f32[16,128], index: 0, kind: input, shape index: {}]
  %s1 = inlined_call_operand.vmem [shape: bf16[128,512], index: 1, kind: input, shape index: {}]
  %s2 = inlined_call_operand.vmem [shape: f32[1,512], index: 2, kind: input, shape index: {}]
  %s3 = inlined_call_operand.vmem [shape: bf16[512,512], index: 3, kind: input, shape index: {}]
  %s4 = inlined_call_operand.vmem [shape: f32[1,512], index: 4, kind: input, shape index: {}]
  %s5 = inlined_call_operand.vmem [shape: bf16[512,128], index: 5, kind: input, shape index: {}]
  %s6 = inlined_call_operand.vmem [shape: f32[1,128], index: 6, kind: input, shape index: {}]
  %s7 = inlined_call_operand.hbm [shape: f32[16,128], index: 7, kind: output, shape index: {}]
  %s8 = sld [smem:[#allocation0]]
  $region38: #{mlp_forward.1} parent=0
    _
  %s10 = ssub.s32 1, %s8
  %s11 = scalar_select 0, %s10, %s8
  $region1: #{mlp_forward.1} parent=0
    #allocation2 [shape = 'u8[8192]{0}', space=vmem, size = 0x2000, scoped, tag = 'output window, operand 0, single buffered']
    #allocation3 [shape = 's32[1]{0}', space=sflag, size = 0x4, scoped, tag = 'scoped memory for mlp_forward.1']
    %12 = vsyncpa [#allocation3], 0
    // Predicated region
    $region2: #{mlp_forward.1} parent=1 // pred_check
      _
    $region3: #{mlp_forward.1} parent=1 // pred_check_branch
      %14 = sbr.rel (0) target = $region5
    $region4: #{mlp_forward.1} parent=1 // pred_region
      _
    $region5: #{mlp_forward.1} parent=1 // pred_fallthru
      _
    // Predicated region
    $region6: #{mlp_forward.1} parent=1 // pred_check
      _
    $region7: #{mlp_forward.1} parent=1 // pred_check_branch
      %16 = sbr.rel (0) target = $region9
    $region8: #{mlp_forward.1} parent=1 // pred_region
      _
    $region9: #{mlp_forward.1} parent=1 // pred_fallthru
      _
    // Predicated region
    $region10: #{mlp_forward.1} parent=1 // pred_check
      _
    $region11: #{mlp_forward.1} parent=1 // pred_check_branch
      %18 = sbr.rel (0) target = $region13
    $region12: #{mlp_forward.1} parent=1 // pred_region
      _
    $region13: #{mlp_forward.1} parent=1 // pred_fallthru
      _
    // Predicated region
    $region14: #{mlp_forward.1} parent=1 // pred_check
      _
    $region15: #{mlp_forward.1} parent=1 // pred_check_branch
      %20 = sbr.rel (0) target = $region17
    $region16: #{mlp_forward.1} parent=1 // pred_region
      _
    $region17: #{mlp_forward.1} parent=1 // pred_fallthru
      _
    // Predicated region
    $region18: #{mlp_forward.1} parent=1 // pred_check
      _
    $region19: #{mlp_forward.1} parent=1 // pred_check_branch
      %22 = sbr.rel (0) target = $region21
    $region20: #{mlp_forward.1} parent=1 // pred_region
      _
    $region21: #{mlp_forward.1} parent=1 // pred_fallthru
      _
    // Predicated region
    $region22: #{mlp_forward.1} parent=1 // pred_check
      _
    $region23: #{mlp_forward.1} parent=1 // pred_check_branch
      %24 = sbr.rel (0) target = $region25
    $region24: #{mlp_forward.1} parent=1 // pred_region
      _
    $region25: #{mlp_forward.1} parent=1 // pred_fallthru
      _
    // Predicated region
    $region26: #{mlp_forward.1} parent=1 // pred_check
      _
    $region27: #{mlp_forward.1} parent=1 // pred_check_branch
      %26 = sbr.rel (0) target = $region29
    $region28: #{mlp_forward.1} parent=1 // pred_region
      _
    $region29: #{mlp_forward.1} parent=1 // pred_fallthru
      _
    %v28 = vld [vmem:[%s0] sm:$0xff]
    %v29 = vld [vmem:[%s0 + $0x8] sm:$0xff]
    %v30 = vpack.c.bf16 %v29, %v28
    %v31 = vld [vmem:[%s1] sm:$0xff]
    %v32 = vld [vmem:[%s1 + $0x8] sm:$0xff]
    %v33 = vld [vmem:[%s1 + $0x10] sm:$0xff]
    %v34 = vld [vmem:[%s1 + $0x18] sm:$0xff]
    %v35 = vld [vmem:[%s1 + $0x20] sm:$0xff]
    %v36 = vld [vmem:[%s1 + $0x28] sm:$0xff]
    %v37 = vld [vmem:[%s1 + $0x30] sm:$0xff]
    %v38 = vld [vmem:[%s1 + $0x38] sm:$0xff]
    %v39 = vld [vmem:[%s1 + $0x40] sm:$0xff]
    %v40 = vld [vmem:[%s1 + $0x48] sm:$0xff]
    %v41 = vld [vmem:[%s1 + $0x50] sm:$0xff]
    %v42 = vld [vmem:[%s1 + $0x58] sm:$0xff]
    %v43 = vld [vmem:[%s1 + $0x60] sm:$0xff]
    %v44 = vld [vmem:[%s1 + $0x68] sm:$0xff]
    %v45 = vld [vmem:[%s1 + $0x70] sm:$0xff]
    %v46 = vld [vmem:[%s1 + $0x78] sm:$0xff]
    %v47 = vld [vmem:[%s1 + $0x80] sm:$0xff]
    %v48 = vld [vmem:[%s1 + $0x88] sm:$0xff]
    %v49 = vld [vmem:[%s1 + $0x90] sm:$0xff]
    %v50 = vld [vmem:[%s1 + $0x98] sm:$0xff]
    %v51 = vld [vmem:[%s1 + $0xa0] sm:$0xff]
    %v52 = vld [vmem:[%s1 + $0xa8] sm:$0xff]
    %v53 = vld [vmem:[%s1 + $0xb0] sm:$0xff]
    %v54 = vld [vmem:[%s1 + $0xb8] sm:$0xff]
    %v55 = vld [vmem:[%s1 + $0xc0] sm:$0xff]
    %v56 = vld [vmem:[%s1 + $0xc8] sm:$0xff]
    %v57 = vld [vmem:[%s1 + $0xd0] sm:$0xff]
    %v58 = vld [vmem:[%s1 + $0xd8] sm:$0xff]
    %v59 = vld [vmem:[%s1 + $0xe0] sm:$0xff]
    %v60 = vld [vmem:[%s1 + $0xe8] sm:$0xff]
    %v61 = vld [vmem:[%s1 + $0xf0] sm:$0xff]
    %v62 = vld [vmem:[%s1 + $0xf8] sm:$0xff]
    %v63 = vld [vmem:[%s2] sm:$0xf]
    %v65 = vlaneseq
    %v66 = vshrl.u32 %v65, 7
    %v67 = vsub.s32 0, %v66
    %v68 = vrot.slane %v63, %v67
    %v69 = vlaneseq
    %v70 = vshrl.u32 %v69, 7
    %v71 = vsub.s32 1, %v70
    %v72 = vrot.slane %v63, %v71
    %v73 = vlaneseq
    %v74 = vshrl.u32 %v73, 7
    %v75 = vsub.s32 2, %v74
    %v76 = vrot.slane %v63, %v75
    %v77 = vlaneseq
    %v78 = vshrl.u32 %v77, 7
    %v79 = vsub.s32 3, %v78
    %v80 = vrot.slane %v63, %v79
    %v117 = vunpack.c.l.b16 %v31
    %v118 = vunpack.c.h.b16 %v31
    %v119 = vunpack.c.l.b16 %v32
    %v120 = vunpack.c.h.b16 %v32
    %v121 = vunpack.c.l.b16 %v33
    %v122 = vunpack.c.h.b16 %v33
    %v123 = vunpack.c.l.b16 %v34
    %v124 = vunpack.c.h.b16 %v34
    %v125 = vunpack.c.l.b16 %v35
    %v126 = vunpack.c.h.b16 %v35
    %v127 = vunpack.c.l.b16 %v36
    %v128 = vunpack.c.h.b16 %v36
    %v129 = vunpack.c.l.b16 %v37
    %v130 = vunpack.c.h.b16 %v37
    %v131 = vunpack.c.l.b16 %v38
    %v132 = vunpack.c.h.b16 %v38
    %v133 = vunpack.c.l.b16 %v39
    %v134 = vunpack.c.h.b16 %v39
    %v135 = vunpack.c.l.b16 %v40
    %v136 = vunpack.c.h.b16 %v40
    %v137 = vunpack.c.l.b16 %v41
    %v138 = vunpack.c.h.b16 %v41
    %v139 = vunpack.c.l.b16 %v42
    %v140 = vunpack.c.h.b16 %v42
    %v141 = vunpack.c.l.b16 %v43
    %v142 = vunpack.c.h.b16 %v43
    %v143 = vunpack.c.l.b16 %v44
    %v144 = vunpack.c.h.b16 %v44
    %v145 = vunpack.c.l.b16 %v45
    %v146 = vunpack.c.h.b16 %v45
    %v147 = vunpack.c.l.b16 %v46
    %v148 = vunpack.c.h.b16 %v46
    %v149 = vunpack.c.l.b16 %v47
    %v150 = vunpack.c.h.b16 %v47
    %v151 = vunpack.c.l.b16 %v48
    %v152 = vunpack.c.h.b16 %v48
    %v153 = vunpack.c.l.b16 %v49
    %v154 = vunpack.c.h.b16 %v49
    %v155 = vunpack.c.l.b16 %v50
    %v156 = vunpack.c.h.b16 %v50
    %v157 = vunpack.c.l.b16 %v51
    %v158 = vunpack.c.h.b16 %v51
    %v159 = vunpack.c.l.b16 %v52
    %v160 = vunpack.c.h.b16 %v52
    %v161 = vunpack.c.l.b16 %v53
    %v162 = vunpack.c.h.b16 %v53
    %v163 = vunpack.c.l.b16 %v54
    %v164 = vunpack.c.h.b16 %v54
    %v165 = vunpack.c.l.b16 %v55
    %v166 = vunpack.c.h.b16 %v55
    %v167 = vunpack.c.l.b16 %v56
    %v168 = vunpack.c.h.b16 %v56
    %v169 = vunpack.c.l.b16 %v57
    %v170 = vunpack.c.h.b16 %v57
    %v171 = vunpack.c.l.b16 %v58
    %v172 = vunpack.c.h.b16 %v58
    %v173 = vunpack.c.l.b16 %v59
    %v174 = vunpack.c.h.b16 %v59
    %v175 = vunpack.c.l.b16 %v60
    %v176 = vunpack.c.h.b16 %v60
    %v177 = vunpack.c.l.b16 %v61
    %v178 = vunpack.c.h.b16 %v61
    %v179 = vunpack.c.l.b16 %v62
    %v180 = vunpack.c.h.b16 %v62
    %v181 = vpack.c.b16 %v121, %v117
    %v182 = vpack.c.b16 %v122, %v118
    %v183 = vpack.c.b16 %v123, %v119
    %v184 = vpack.c.b16 %v124, %v120
    %v185 = vpack.c.b16 %v129, %v125
    %v186 = vpack.c.b16 %v130, %v126
    %v187 = vpack.c.b16 %v131, %v127
    %v188 = vpack.c.b16 %v132, %v128
    %v189 = vpack.c.b16 %v137, %v133
    %v190 = vpack.c.b16 %v138, %v134
    %v191 = vpack.c.b16 %v139, %v135
    %v192 = vpack.c.b16 %v140, %v136
    %v193 = vpack.c.b16 %v145, %v141
    %v194 = vpack.c.b16 %v146, %v142
    %v195 = vpack.c.b16 %v147, %v143
    %v196 = vpack.c.b16 %v148, %v144
    %v197 = vpack.c.b16 %v153, %v149
    %v198 = vpack.c.b16 %v154, %v150
    %v199 = vpack.c.b16 %v155, %v151
    %v200 = vpack.c.b16 %v156, %v152
    %v201 = vpack.c.b16 %v161, %v157
    %v202 = vpack.c.b16 %v162, %v158
    %v203 = vpack.c.b16 %v163, %v159
    %v204 = vpack.c.b16 %v164, %v160
    %v205 = vpack.c.b16 %v169, %v165
    %v206 = vpack.c.b16 %v170, %v166
    %v207 = vpack.c.b16 %v171, %v167
    %v208 = vpack.c.b16 %v172, %v168
    %v209 = vpack.c.b16 %v177, %v173
    %v210 = vpack.c.b16 %v178, %v174
    %v211 = vpack.c.b16 %v179, %v175
    %v212 = vpack.c.b16 %v180, %v176
    %245 = vmatprep.subr.bf16.mxu0 %v210
    %246 = vmatpush1.bf16.msra.mxu0 %v209
    %247 = vmatprep.subr.bf16.mxu0 %v206
    %248 = vmatpush1.bf16.msra.mxu0 %v205
    %249 = vmatprep.subr.bf16.mxu0 %v202
    %250 = vmatpush1.bf16.msra.mxu0 %v201
    %251 = vmatprep.subr.bf16.mxu0 %v198
    %252 = vmatpush1.bf16.msra.mxu0 %v197
    %253 = vmatprep.subr.bf16.mxu0 %v194
    %254 = vmatpush1.bf16.msra.mxu0 %v193
    %255 = vmatprep.subr.bf16.mxu0 %v190
    %256 = vmatpush1.bf16.msra.mxu0 %v189
    %257 = vmatprep.subr.bf16.mxu0 %v186
    %258 = vmatpush1.bf16.msra.mxu0 %v185
    %259 = vmatprep.subr.bf16.mxu0 %v182
    %260 = vmatpush1.bf16.msra.mxu0 %v181
    %261 = vmatprep.subr.bf16.mxu0 0
    %262 = vmatpush2.bf16.msra.mxu0 0
    %263 = vmatprep.subr.bf16.mxu0 0
    %264 = vmatpush2.bf16.msra.mxu0 0
    %265 = vmatprep.subr.bf16.mxu0 0
    %266 = vmatpush2.bf16.msra.mxu0 0
    %267 = vmatprep.subr.bf16.mxu0 0
    %268 = vmatpush2.bf16.msra.mxu0 0
    %269 = vmatprep.subr.bf16.mxu0 0
    %270 = vmatpush2.bf16.msra.mxu0 0
    %271 = vmatprep.subr.bf16.mxu0 0
    %272 = vmatpush2.bf16.msra.mxu0 0
    %273 = vmatprep.subr.bf16.mxu0 0
    %274 = vmatpush2.bf16.msra.mxu0 0
    %275 = vmatprep.subr.bf16.mxu0 0
    %276 = vmatpush2.bf16.msra.mxu0 0
    %277 = vmatprep.mubr.bf16.mxu0 0
    %278 = vmatmul.mubr.bf16.gmra.mxu0 %v30
    %v279 = vpop.f32.mrf.mxu0
    %v280 = vadd.f32 %v68, %v279
    %v281 = vpop.f32.mrf.mxu0
    %v282 = vadd.f32 %v72, %v281
    %v283 = vpop.f32.mrf.mxu0
    %v284 = vadd.f32 %v68, %v283
    %v285 = vpop.f32.mrf.mxu0
    %v286 = vadd.f32 %v72, %v285
    %287 = vdwg.mxu0
    %288 = vmatprep.subr.bf16.mxu0 %v212
    %289 = vmatpush1.bf16.msra.mxu0 %v211
    %290 = vmatprep.subr.bf16.mxu0 %v208
    %291 = vmatpush1.bf16.msra.mxu0 %v207
    %292 = vmatprep.subr.bf16.mxu0 %v204
    %293 = vmatpush1.bf16.msra.mxu0 %v203
    %294 = vmatprep.subr.bf16.mxu0 %v200
    %295 = vmatpush1.bf16.msra.mxu0 %v199
    %296 = vmatprep.subr.bf16.mxu0 %v196
    %297 = vmatpush1.bf16.msra.mxu0 %v195
    %298 = vmatprep.subr.bf16.mxu0 %v192
    %299 = vmatpush1.bf16.msra.mxu0 %v191
    %300 = vmatprep.subr.bf16.mxu0 %v188
    %301 = vmatpush1.bf16.msra.mxu0 %v187
    %302 = vmatprep.subr.bf16.mxu0 %v184
    %303 = vmatpush1.bf16.msra.mxu0 %v183
    %304 = vmatprep.subr.bf16.mxu0 0
    %305 = vmatpush2.bf16.msra.mxu0 0
    %306 = vmatprep.subr.bf16.mxu0 0
    %307 = vmatpush2.bf16.msra.mxu0 0
    %308 = vmatprep.subr.bf16.mxu0 0
    %309 = vmatpush2.bf16.msra.mxu0 0
    %310 = vmatprep.subr.bf16.mxu0 0
    %311 = vmatpush2.bf16.msra.mxu0 0
    %312 = vmatprep.subr.bf16.mxu0 0
    %313 = vmatpush2.bf16.msra.mxu0 0
    %314 = vmatprep.subr.bf16.mxu0 0
    %315 = vmatpush2.bf16.msra.mxu0 0
    %316 = vmatprep.subr.bf16.mxu0 0
    %317 = vmatpush2.bf16.msra.mxu0 0
    %318 = vmatprep.subr.bf16.mxu0 0
    %319 = vmatpush2.bf16.msra.mxu0 0
    %320 = vmatprep.mubr.bf16.mxu0 0
    %321 = vmatmul.mubr.bf16.gmra.mxu0 %v30
    %v322 = vpop.f32.mrf.mxu0
    %v323 = vadd.f32 %v76, %v322
    %v324 = vpop.f32.mrf.mxu0
    %v325 = vadd.f32 %v80, %v324
    %v326 = vpop.f32.mrf.mxu0
    %v327 = vadd.f32 %v76, %v326
    %v328 = vpop.f32.mrf.mxu0
    %v329 = vadd.f32 %v80, %v328
    %330 = vdwg.mxu0
    %v331 = vmax.f32 %v280, 0.0
    %v332 = vmax.f32 %v282, 0.0
    %v333 = vmax.f32 %v323, 0.0
    %v334 = vmax.f32 %v325, 0.0
    %v335 = vmax.f32 %v284, 0.0
    %v336 = vmax.f32 %v286, 0.0
    %v337 = vmax.f32 %v327, 0.0
    %v338 = vmax.f32 %v329, 0.0
    %v339 = vpack.c.bf16 %v335, %v331
    %v340 = vpack.c.bf16 %v336, %v332
    %v341 = vpack.c.bf16 %v337, %v333
    %v342 = vpack.c.bf16 %v338, %v334
    %v343 = vld [vmem:[%s3] sm:$0xff]
    %v344 = vld [vmem:[%s3 + $0x8] sm:$0xff]
    %v345 = vld [vmem:[%s3 + $0x10] sm:$0xff]
    %v346 = vld [vmem:[%s3 + $0x18] sm:$0xff]
    %v347 = vld [vmem:[%s3 + $0x20] sm:$0xff]
    %v348 = vld [vmem:[%s3 + $0x28] sm:$0xff]
    %v349 = vld [vmem:[%s3 + $0x30] sm:$0xff]
    %v350 = vld [vmem:[%s3 + $0x38] sm:$0xff]
    %v351 = vld [vmem:[%s3 + $0x40] sm:$0xff]
    %v352 = vld [vmem:[%s3 + $0x48] sm:$0xff]
    %v353 = vld [vmem:[%s3 + $0x50] sm:$0xff]
    %v354 = vld [vmem:[%s3 + $0x58] sm:$0xff]
    %v355 = vld [vmem:[%s3 + $0x60] sm:$0xff]
    %v356 = vld [vmem:[%s3 + $0x68] sm:$0xff]
    %v357 = vld [vmem:[%s3 + $0x70] sm:$0xff]
    %v358 = vld [vmem:[%s3 + $0x78] sm:$0xff]
    %v359 = vld [vmem:[%s3 + $0x80] sm:$0xff]
    %v360 = vld [vmem:[%s3 + $0x88] sm:$0xff]
    %v361 = vld [vmem:[%s3 + $0x90] sm:$0xff]
    %v362 = vld [vmem:[%s3 + $0x98] sm:$0xff]
    %v363 = vld [vmem:[%s3 + $0xa0] sm:$0xff]
    %v364 = vld [vmem:[%s3 + $0xa8] sm:$0xff]
    %v365 = vld [vmem:[%s3 + $0xb0] sm:$0xff]
    %v366 = vld [vmem:[%s3 + $0xb8] sm:$0xff]
    %v367 = vld [vmem:[%s3 + $0xc0] sm:$0xff]
    %v368 = vld [vmem:[%s3 + $0xc8] sm:$0xff]
    %v369 = vld [vmem:[%s3 + $0xd0] sm:$0xff]
    %v370 = vld [vmem:[%s3 + $0xd8] sm:$0xff]
    %v371 = vld [vmem:[%s3 + $0xe0] sm:$0xff]
    %v372 = vld [vmem:[%s3 + $0xe8] sm:$0xff]
    %v373 = vld [vmem:[%s3 + $0xf0] sm:$0xff]
    %v374 = vld [vmem:[%s3 + $0xf8] sm:$0xff]
    %v375 = vld [vmem:[%s3 + $0x100] sm:$0xff]
    %v376 = vld [vmem:[%s3 + $0x108] sm:$0xff]
    %v377 = vld [vmem:[%s3 + $0x110] sm:$0xff]
    %v378 = vld [vmem:[%s3 + $0x118] sm:$0xff]
    %v379 = vld [vmem:[%s3 + $0x120] sm:$0xff]
    %v380 = vld [vmem:[%s3 + $0x128] sm:$0xff]
    %v381 = vld [vmem:[%s3 + $0x130] sm:$0xff]
    %v382 = vld [vmem:[%s3 + $0x138] sm:$0xff]
    %v383 = vld [vmem:[%s3 + $0x140] sm:$0xff]
    %v384 = vld [vmem:[%s3 + $0x148] sm:$0xff]
    %v385 = vld [vmem:[%s3 + $0x150] sm:$0xff]
    %v386 = vld [vmem:[%s3 + $0x158] sm:$0xff]
    %v387 = vld [vmem:[%s3 + $0x160] sm:$0xff]
    %v388 = vld [vmem:[%s3 + $0x168] sm:$0xff]
    %v389 = vld [vmem:[%s3 + $0x170] sm:$0xff]
    %v390 = vld [vmem:[%s3 + $0x178] sm:$0xff]
    %v391 = vld [vmem:[%s3 + $0x180] sm:$0xff]
    %v392 = vld [vmem:[%s3 + $0x188] sm:$0xff]
    %v393 = vld [vmem:[%s3 + $0x190] sm:$0xff]
    %v394 = vld [vmem:[%s3 + $0x198] sm:$0xff]
    %v395 = vld [vmem:[%s3 + $0x1a0] sm:$0xff]
    %v396 = vld [vmem:[%s3 + $0x1a8] sm:$0xff]
    %v397 = vld [vmem:[%s3 + $0x1b0] sm:$0xff]
    %v398 = vld [vmem:[%s3 + $0x1b8] sm:$0xff]
    %v399 = vld [vmem:[%s3 + $0x1c0] sm:$0xff]
    %v400 = vld [vmem:[%s3 + $0x1c8] sm:$0xff]
    %v401 = vld [vmem:[%s3 + $0x1d0] sm:$0xff]
    %v402 = vld [vmem:[%s3 + $0x1d8] sm:$0xff]
    %v403 = vld [vmem:[%s3 + $0x1e0] sm:$0xff]
    %v404 = vld [vmem:[%s3 + $0x1e8] sm:$0xff]
    %v405 = vld [vmem:[%s3 + $0x1f0] sm:$0xff]
    %v406 = vld [vmem:[%s3 + $0x1f8] sm:$0xff]
    %v407 = vld [vmem:[%s3 + $0x200] sm:$0xff]
    %v408 = vld [vmem:[%s3 + $0x208] sm:$0xff]
    %v409 = vld [vmem:[%s3 + $0x210] sm:$0xff]
    %v410 = vld [vmem:[%s3 + $0x218] sm:$0xff]
    %v411 = vld [vmem:[%s3 + $0x220] sm:$0xff]
    %v412 = vld [vmem:[%s3 + $0x228] sm:$0xff]
    %v413 = vld [vmem:[%s3 + $0x230] sm:$0xff]
    %v414 = vld [vmem:[%s3 + $0x238] sm:$0xff]
    %v415 = vld [vmem:[%s3 + $0x240] sm:$0xff]
    %v416 = vld [vmem:[%s3 + $0x248] sm:$0xff]
    %v417 = vld [vmem:[%s3 + $0x250] sm:$0xff]
    %v418 = vld [vmem:[%s3 + $0x258] sm:$0xff]
    %v419 = vld [vmem:[%s3 + $0x260] sm:$0xff]
    %v420 = vld [vmem:[%s3 + $0x268] sm:$0xff]
    %v421 = vld [vmem:[%s3 + $0x270] sm:$0xff]
    %v422 = vld [vmem:[%s3 + $0x278] sm:$0xff]
    %v423 = vld [vmem:[%s3 + $0x280] sm:$0xff]
    %v424 = vld [vmem:[%s3 + $0x288] sm:$0xff]
    %v425 = vld [vmem:[%s3 + $0x290] sm:$0xff]
    %v426 = vld [vmem:[%s3 + $0x298] sm:$0xff]
    %v427 = vld [vmem:[%s3 + $0x2a0] sm:$0xff]
    %v428 = vld [vmem:[%s3 + $0x2a8] sm:$0xff]
    %v429 = vld [vmem:[%s3 + $0x2b0] sm:$0xff]
    %v430 = vld [vmem:[%s3 + $0x2b8] sm:$0xff]
    %v431 = vld [vmem:[%s3 + $0x2c0] sm:$0xff]
    %v432 = vld [vmem:[%s3 + $0x2c8] sm:$0xff]
    %v433 = vld [vmem:[%s3 + $0x2d0] sm:$0xff]
    %v434 = vld [vmem:[%s3 + $0x2d8] sm:$0xff]
    %v435 = vld [vmem:[%s3 + $0x2e0] sm:$0xff]
    %v436 = vld [vmem:[%s3 + $0x2e8] sm:$0xff]
    %v437 = vld [vmem:[%s3 + $0x2f0] sm:$0xff]
    %v438 = vld [vmem:[%s3 + $0x2f8] sm:$0xff]
    %v439 = vld [vmem:[%s3 + $0x300] sm:$0xff]
    %v440 = vld [vmem:[%s3 + $0x308] sm:$0xff]
    %v441 = vld [vmem:[%s3 + $0x310] sm:$0xff]
    %v442 = vld [vmem:[%s3 + $0x318] sm:$0xff]
    %v443 = vld [vmem:[%s3 + $0x320] sm:$0xff]
    %v444 = vld [vmem:[%s3 + $0x328] sm:$0xff]
    %v445 = vld [vmem:[%s3 + $0x330] sm:$0xff]
    %v446 = vld [vmem:[%s3 + $0x338] sm:$0xff]
    %v447 = vld [vmem:[%s3 + $0x340] sm:$0xff]
    %v448 = vld [vmem:[%s3 + $0x348] sm:$0xff]
    %v449 = vld [vmem:[%s3 + $0x350] sm:$0xff]
    %v450 = vld [vmem:[%s3 + $0x358] sm:$0xff]
    %v451 = vld [vmem:[%s3 + $0x360] sm:$0xff]
    %v452 = vld [vmem:[%s3 + $0x368] sm:$0xff]
    %v453 = vld [vmem:[%s3 + $0x370] sm:$0xff]
    %v454 = vld [vmem:[%s3 + $0x378] sm:$0xff]
    %v455 = vld [vmem:[%s3 + $0x380] sm:$0xff]
    %v456 = vld [vmem:[%s3 + $0x388] sm:$0xff]
    %v457 = vld [vmem:[%s3 + $0x390] sm:$0xff]
    %v458 = vld [vmem:[%s3 + $0x398] sm:$0xff]
    %v459 = vld [vmem:[%s3 + $0x3a0] sm:$0xff]
    %v460 = vld [vmem:[%s3 + $0x3a8] sm:$0xff]
    %v461 = vld [vmem:[%s3 + $0x3b0] sm:$0xff]
    %v462 = vld [vmem:[%s3 + $0x3b8] sm:$0xff]
    %v463 = vld [vmem:[%s3 + $0x3c0] sm:$0xff]
    %v464 = vld [vmem:[%s3 + $0x3c8] sm:$0xff]
    %v465 = vld [vmem:[%s3 + $0x3d0] sm:$0xff]
    %v466 = vld [vmem:[%s3 + $0x3d8] sm:$0xff]
    %v467 = vld [vmem:[%s3 + $0x3e0] sm:$0xff]
    %v468 = vld [vmem:[%s3 + $0x3e8] sm:$0xff]
    %v469 = vld [vmem:[%s3 + $0x3f0] sm:$0xff]
    %v470 = vld [vmem:[%s3 + $0x3f8] sm:$0xff]
    %v471 = vld [vmem:[%s4] sm:$0xf]
    %v473 = vlaneseq
    %v474 = vshrl.u32 %v473, 7
    %v475 = vsub.s32 0, %v474
    %v476 = vrot.slane %v471, %v475
    %v477 = vlaneseq
    %v478 = vshrl.u32 %v477, 7
    %v479 = vsub.s32 1, %v478
    %v480 = vrot.slane %v471, %v479
    %v481 = vlaneseq
    %v482 = vshrl.u32 %v481, 7
    %v483 = vsub.s32 2, %v482
    %v484 = vrot.slane %v471, %v483
    %v485 = vlaneseq
    %v486 = vshrl.u32 %v485, 7
    %v487 = vsub.s32 3, %v486
    %v488 = vrot.slane %v471, %v487
    %v621 = vunpack.c.l.b16 %v343
    %v622 = vunpack.c.h.b16 %v343
    %v623 = vunpack.c.l.b16 %v344
    %v624 = vunpack.c.h.b16 %v344
    %v625 = vunpack.c.l.b16 %v345
    %v626 = vunpack.c.h.b16 %v345
    %v627 = vunpack.c.l.b16 %v346
    %v628 = vunpack.c.h.b16 %v346
    %v629 = vunpack.c.l.b16 %v347
    %v630 = vunpack.c.h.b16 %v347
    %v631 = vunpack.c.l.b16 %v348
    %v632 = vunpack.c.h.b16 %v348
    %v633 = vunpack.c.l.b16 %v349
    %v634 = vunpack.c.h.b16 %v349
    %v635 = vunpack.c.l.b16 %v350
    %v636 = vunpack.c.h.b16 %v350
    %v637 = vunpack.c.l.b16 %v351
    %v638 = vunpack.c.h.b16 %v351
    %v639 = vunpack.c.l.b16 %v352
    %v640 = vunpack.c.h.b16 %v352
    %v641 = vunpack.c.l.b16 %v353
    %v642 = vunpack.c.h.b16 %v353
    %v643 = vunpack.c.l.b16 %v354
    %v644 = vunpack.c.h.b16 %v354
    %v645 = vunpack.c.l.b16 %v355
    %v646 = vunpack.c.h.b16 %v355
    %v647 = vunpack.c.l.b16 %v356
    %v648 = vunpack.c.h.b16 %v356
    %v649 = vunpack.c.l.b16 %v357
    %v650 = vunpack.c.h.b16 %v357
    %v651 = vunpack.c.l.b16 %v358
    %v652 = vunpack.c.h.b16 %v358
    %v653 = vunpack.c.l.b16 %v359
    %v654 = vunpack.c.h.b16 %v359
    %v655 = vunpack.c.l.b16 %v360
    %v656 = vunpack.c.h.b16 %v360
    %v657 = vunpack.c.l.b16 %v361
    %v658 = vunpack.c.h.b16 %v361
    %v659 = vunpack.c.l.b16 %v362
    %v660 = vunpack.c.h.b16 %v362
    %v661 = vunpack.c.l.b16 %v363
    %v662 = vunpack.c.h.b16 %v363
    %v663 = vunpack.c.l.b16 %v364
    %v664 = vunpack.c.h.b16 %v364
    %v665 = vunpack.c.l.b16 %v365
    %v666 = vunpack.c.h.b16 %v365
    %v667 = vunpack.c.l.b16 %v366
    %v668 = vunpack.c.h.b16 %v366
    %v669 = vunpack.c.l.b16 %v367
    %v670 = vunpack.c.h.b16 %v367
    %v671 = vunpack.c.l.b16 %v368
    %v672 = vunpack.c.h.b16 %v368
    %v673 = vunpack.c.l.b16 %v369
    %v674 = vunpack.c.h.b16 %v369
    %v675 = vunpack.c.l.b16 %v370
    %v676 = vunpack.c.h.b16 %v370
    %v677 = vunpack.c.l.b16 %v371
    %v678 = vunpack.c.h.b16 %v371
    %v679 = vunpack.c.l.b16 %v372
    %v680 = vunpack.c.h.b16 %v372
    %v681 = vunpack.c.l.b16 %v373
    %v682 = vunpack.c.h.b16 %v373
    %v683 = vunpack.c.l.b16 %v374
    %v684 = vunpack.c.h.b16 %v374
    %v685 = vunpack.c.l.b16 %v375
    %v686 = vunpack.c.h.b16 %v375
    %v687 = vunpack.c.l.b16 %v376
    %v688 = vunpack.c.h.b16 %v376
    %v689 = vunpack.c.l.b16 %v377
    %v690 = vunpack.c.h.b16 %v377
    %v691 = vunpack.c.l.b16 %v378
    %v692 = vunpack.c.h.b16 %v378
    %v693 = vunpack.c.l.b16 %v379
    %v694 = vunpack.c.h.b16 %v379
    %v695 = vunpack.c.l.b16 %v380
    %v696 = vunpack.c.h.b16 %v380
    %v697 = vunpack.c.l.b16 %v381
    %v698 = vunpack.c.h.b16 %v381
    %v699 = vunpack.c.l.b16 %v382
    %v700 = vunpack.c.h.b16 %v382
    %v701 = vunpack.c.l.b16 %v383
    %v702 = vunpack.c.h.b16 %v383
    %v703 = vunpack.c.l.b16 %v384
    %v704 = vunpack.c.h.b16 %v384
    %v705 = vunpack.c.l.b16 %v385
    %v706 = vunpack.c.h.b16 %v385
    %v707 = vunpack.c.l.b16 %v386
    %v708 = vunpack.c.h.b16 %v386
    %v709 = vunpack.c.l.b16 %v387
    %v710 = vunpack.c.h.b16 %v387
    %v711 = vunpack.c.l.b16 %v388
    %v712 = vunpack.c.h.b16 %v388
    %v713 = vunpack.c.l.b16 %v389
    %v714 = vunpack.c.h.b16 %v389
    %v715 = vunpack.c.l.b16 %v390
    %v716 = vunpack.c.h.b16 %v390
    %v717 = vunpack.c.l.b16 %v391
    %v718 = vunpack.c.h.b16 %v391
    %v719 = vunpack.c.l.b16 %v392
    %v720 = vunpack.c.h.b16 %v392
    %v721 = vunpack.c.l.b16 %v393
    %v722 = vunpack.c.h.b16 %v393
    %v723 = vunpack.c.l.b16 %v394
    %v724 = vunpack.c.h.b16 %v394
    %v725 = vunpack.c.l.b16 %v395
    %v726 = vunpack.c.h.b16 %v395
    %v727 = vunpack.c.l.b16 %v396
    %v728 = vunpack.c.h.b16 %v396
    %v729 = vunpack.c.l.b16 %v397
    %v730 = vunpack.c.h.b16 %v397
    %v731 = vunpack.c.l.b16 %v398
    %v732 = vunpack.c.h.b16 %v398
    %v733 = vunpack.c.l.b16 %v399
    %v734 = vunpack.c.h.b16 %v399
    %v735 = vunpack.c.l.b16 %v400
    %v736 = vunpack.c.h.b16 %v400
    %v737 = vunpack.c.l.b16 %v401
    %v738 = vunpack.c.h.b16 %v401
    %v739 = vunpack.c.l.b16 %v402
    %v740 = vunpack.c.h.b16 %v402
    %v741 = vunpack.c.l.b16 %v403
    %v742 = vunpack.c.h.b16 %v403
    %v743 = vunpack.c.l.b16 %v404
    %v744 = vunpack.c.h.b16 %v404
    %v745 = vunpack.c.l.b16 %v405
    %v746 = vunpack.c.h.b16 %v405
    %v747 = vunpack.c.l.b16 %v406
    %v748 = vunpack.c.h.b16 %v406
    %v749 = vunpack.c.l.b16 %v407
    %v750 = vunpack.c.h.b16 %v407
    %v751 = vunpack.c.l.b16 %v408
    %v752 = vunpack.c.h.b16 %v408
    %v753 = vunpack.c.l.b16 %v409
    %v754 = vunpack.c.h.b16 %v409
    %v755 = vunpack.c.l.b16 %v410
    %v756 = vunpack.c.h.b16 %v410
    %v757 = vunpack.c.l.b16 %v411
    %v758 = vunpack.c.h.b16 %v411
    %v759 = vunpack.c.l.b16 %v412
    %v760 = vunpack.c.h.b16 %v412
    %v761 = vunpack.c.l.b16 %v413
    %v762 = vunpack.c.h.b16 %v413
    %v763 = vunpack.c.l.b16 %v414
    %v764 = vunpack.c.h.b16 %v414
    %v765 = vunpack.c.l.b16 %v415
    %v766 = vunpack.c.h.b16 %v415
    %v767 = vunpack.c.l.b16 %v416
    %v768 = vunpack.c.h.b16 %v416
    %v769 = vunpack.c.l.b16 %v417
    %v770 = vunpack.c.h.b16 %v417
    %v771 = vunpack.c.l.b16 %v418
    %v772 = vunpack.c.h.b16 %v418
    %v773 = vunpack.c.l.b16 %v419
    %v774 = vunpack.c.h.b16 %v419
    %v775 = vunpack.c.l.b16 %v420
    %v776 = vunpack.c.h.b16 %v420
    %v777 = vunpack.c.l.b16 %v421
    %v778 = vunpack.c.h.b16 %v421
    %v779 = vunpack.c.l.b16 %v422
    %v780 = vunpack.c.h.b16 %v422
    %v781 = vunpack.c.l.b16 %v423
    %v782 = vunpack.c.h.b16 %v423
    %v783 = vunpack.c.l.b16 %v424
    %v784 = vunpack.c.h.b16 %v424
    %v785 = vunpack.c.l.b16 %v425
    %v786 = vunpack.c.h.b16 %v425
    %v787 = vunpack.c.l.b16 %v426
    %v788 = vunpack.c.h.b16 %v426
    %v789 = vunpack.c.l.b16 %v427
    %v790 = vunpack.c.h.b16 %v427
    %v791 = vunpack.c.l.b16 %v428
    %v792 = vunpack.c.h.b16 %v428
    %v793 = vunpack.c.l.b16 %v429
    %v794 = vunpack.c.h.b16 %v429
    %v795 = vunpack.c.l.b16 %v430
    %v796 = vunpack.c.h.b16 %v430
    %v797 = vunpack.c.l.b16 %v431
    %v798 = vunpack.c.h.b16 %v431
    %v799 = vunpack.c.l.b16 %v432
    %v800 = vunpack.c.h.b16 %v432
    %v801 = vunpack.c.l.b16 %v433
    %v802 = vunpack.c.h.b16 %v433
    %v803 = vunpack.c.l.b16 %v434
    %v804 = vunpack.c.h.b16 %v434
    %v805 = vunpack.c.l.b16 %v435
    %v806 = vunpack.c.h.b16 %v435
    %v807 = vunpack.c.l.b16 %v436
    %v808 = vunpack.c.h.b16 %v436
    %v809 = vunpack.c.l.b16 %v437
    %v810 = vunpack.c.h.b16 %v437
    %v811 = vunpack.c.l.b16 %v438
    %v812 = vunpack.c.h.b16 %v438
    %v813 = vunpack.c.l.b16 %v439
    %v814 = vunpack.c.h.b16 %v439
    %v815 = vunpack.c.l.b16 %v440
    %v816 = vunpack.c.h.b16 %v440
    %v817 = vunpack.c.l.b16 %v441
    %v818 = vunpack.c.h.b16 %v441
    %v819 = vunpack.c.l.b16 %v442
    %v820 = vunpack.c.h.b16 %v442
    %v821 = vunpack.c.l.b16 %v443
    %v822 = vunpack.c.h.b16 %v443
    %v823 = vunpack.c.l.b16 %v444
    %v824 = vunpack.c.h.b16 %v444
    %v825 = vunpack.c.l.b16 %v445
    %v826 = vunpack.c.h.b16 %v445
    %v827 = vunpack.c.l.b16 %v446
    %v828 = vunpack.c.h.b16 %v446
    %v829 = vunpack.c.l.b16 %v447
    %v830 = vunpack.c.h.b16 %v447
    %v831 = vunpack.c.l.b16 %v448
    %v832 = vunpack.c.h.b16 %v448
    %v833 = vunpack.c.l.b16 %v449
    %v834 = vunpack.c.h.b16 %v449
    %v835 = vunpack.c.l.b16 %v450
    %v836 = vunpack.c.h.b16 %v450
    %v837 = vunpack.c.l.b16 %v451
    %v838 = vunpack.c.h.b16 %v451
    %v839 = vunpack.c.l.b16 %v452
    %v840 = vunpack.c.h.b16 %v452
    %v841 = vunpack.c.l.b16 %v453
    %v842 = vunpack.c.h.b16 %v453
    %v843 = vunpack.c.l.b16 %v454
    %v844 = vunpack.c.h.b16 %v454
    %v845 = vunpack.c.l.b16 %v455
    %v846 = vunpack.c.h.b16 %v455
    %v847 = vunpack.c.l.b16 %v456
    %v848 = vunpack.c.h.b16 %v456
    %v849 = vunpack.c.l.b16 %v457
    %v850 = vunpack.c.h.b16 %v457
    %v851 = vunpack.c.l.b16 %v458
    %v852 = vunpack.c.h.b16 %v458
    %v853 = vunpack.c.l.b16 %v459
    %v854 = vunpack.c.h.b16 %v459
    %v855 = vunpack.c.l.b16 %v460
    %v856 = vunpack.c.h.b16 %v460
    %v857 = vunpack.c.l.b16 %v461
    %v858 = vunpack.c.h.b16 %v461
    %v859 = vunpack.c.l.b16 %v462
    %v860 = vunpack.c.h.b16 %v462
    %v861 = vunpack.c.l.b16 %v463
    %v862 = vunpack.c.h.b16 %v463
    %v863 = vunpack.c.l.b16 %v464
    %v864 = vunpack.c.h.b16 %v464
    %v865 = vunpack.c.l.b16 %v465
    %v866 = vunpack.c.h.b16 %v465
    %v867 = vunpack.c.l.b16 %v466
    %v868 = vunpack.c.h.b16 %v466
    %v869 = vunpack.c.l.b16 %v467
    %v870 = vunpack.c.h.b16 %v467
    %v871 = vunpack.c.l.b16 %v468
    %v872 = vunpack.c.h.b16 %v468
    %v873 = vunpack.c.l.b16 %v469
    %v874 = vunpack.c.h.b16 %v469
    %v875 = vunpack.c.l.b16 %v470
    %v876 = vunpack.c.h.b16 %v470
    %v877 = vpack.c.b16 %v625, %v621
    %v878 = vpack.c.b16 %v626, %v622
    %v879 = vpack.c.b16 %v627, %v623
    %v880 = vpack.c.b16 %v628, %v624
    %v881 = vpack.c.b16 %v633, %v629
    %v882 = vpack.c.b16 %v634, %v630
    %v883 = vpack.c.b16 %v635, %v631
    %v884 = vpack.c.b16 %v636, %v632
    %v885 = vpack.c.b16 %v641, %v637
    %v886 = vpack.c.b16 %v642, %v638
    %v887 = vpack.c.b16 %v643, %v639
    %v888 = vpack.c.b16 %v644, %v640
    %v889 = vpack.c.b16 %v649, %v645
    %v890 = vpack.c.b16 %v650, %v646
    %v891 = vpack.c.b16 %v651, %v647
    %v892 = vpack.c.b16 %v652, %v648
    %v893 = vpack.c.b16 %v657, %v653
    %v894 = vpack.c.b16 %v658, %v654
    %v895 = vpack.c.b16 %v659, %v655
    %v896 = vpack.c.b16 %v660, %v656
    %v897 = vpack.c.b16 %v665, %v661
    %v898 = vpack.c.b16 %v666, %v662
    %v899 = vpack.c.b16 %v667, %v663
    %v900 = vpack.c.b16 %v668, %v664
    %v901 = vpack.c.b16 %v673, %v669
    %v902 = vpack.c.b16 %v674, %v670
    %v903 = vpack.c.b16 %v675, %v671
    %v904 = vpack.c.b16 %v676, %v672
    %v905 = vpack.c.b16 %v681, %v677
    %v906 = vpack.c.b16 %v682, %v678
    %v907 = vpack.c.b16 %v683, %v679
    %v908 = vpack.c.b16 %v684, %v680
    %v909 = vpack.c.b16 %v689, %v685
    %v910 = vpack.c.b16 %v690, %v686
    %v911 = vpack.c.b16 %v691, %v687
    %v912 = vpack.c.b16 %v692, %v688
    %v913 = vpack.c.b16 %v697, %v693
    %v914 = vpack.c.b16 %v698, %v694
    %v915 = vpack.c.b16 %v699, %v695
    %v916 = vpack.c.b16 %v700, %v696
    %v917 = vpack.c.b16 %v705, %v701
    %v918 = vpack.c.b16 %v706, %v702
    %v919 = vpack.c.b16 %v707, %v703
    %v920 = vpack.c.b16 %v708, %v704
    %v921 = vpack.c.b16 %v713, %v709
    %v922 = vpack.c.b16 %v714, %v710
    %v923 = vpack.c.b16 %v715, %v711
    %v924 = vpack.c.b16 %v716, %v712
    %v925 = vpack.c.b16 %v721, %v717
    %v926 = vpack.c.b16 %v722, %v718
    %v927 = vpack.c.b16 %v723, %v719
    %v928 = vpack.c.b16 %v724, %v720
    %v929 = vpack.c.b16 %v729, %v725
    %v930 = vpack.c.b16 %v730, %v726
    %v931 = vpack.c.b16 %v731, %v727
    %v932 = vpack.c.b16 %v732, %v728
    %v933 = vpack.c.b16 %v737, %v733
    %v934 = vpack.c.b16 %v738, %v734
    %v935 = vpack.c.b16 %v739, %v735
    %v936 = vpack.c.b16 %v740, %v736
    %v937 = vpack.c.b16 %v745, %v741
    %v938 = vpack.c.b16 %v746, %v742
    %v939 = vpack.c.b16 %v747, %v743
    %v940 = vpack.c.b16 %v748, %v744
    %v941 = vpack.c.b16 %v753, %v749
    %v942 = vpack.c.b16 %v754, %v750
    %v943 = vpack.c.b16 %v755, %v751
    %v944 = vpack.c.b16 %v756, %v752
    %v945 = vpack.c.b16 %v761, %v757
    %v946 = vpack.c.b16 %v762, %v758
    %v947 = vpack.c.b16 %v763, %v759
    %v948 = vpack.c.b16 %v764, %v760
    %v949 = vpack.c.b16 %v769, %v765
    %v950 = vpack.c.b16 %v770, %v766
    %v951 = vpack.c.b16 %v771, %v767
    %v952 = vpack.c.b16 %v772, %v768
    %v953 = vpack.c.b16 %v777, %v773
    %v954 = vpack.c.b16 %v778, %v774
    %v955 = vpack.c.b16 %v779, %v775
    %v956 = vpack.c.b16 %v780, %v776
    %v957 = vpack.c.b16 %v785, %v781
    %v958 = vpack.c.b16 %v786, %v782
    %v959 = vpack.c.b16 %v787, %v783
    %v960 = vpack.c.b16 %v788, %v784
    %v961 = vpack.c.b16 %v793, %v789
    %v962 = vpack.c.b16 %v794, %v790
    %v963 = vpack.c.b16 %v795, %v791
    %v964 = vpack.c.b16 %v796, %v792
    %v965 = vpack.c.b16 %v801, %v797
    %v966 = vpack.c.b16 %v802, %v798
    %v967 = vpack.c.b16 %v803, %v799
    %v968 = vpack.c.b16 %v804, %v800
    %v969 = vpack.c.b16 %v809, %v805
    %v970 = vpack.c.b16 %v810, %v806
    %v971 = vpack.c.b16 %v811, %v807
    %v972 = vpack.c.b16 %v812, %v808
    %v973 = vpack.c.b16 %v817, %v813
    %v974 = vpack.c.b16 %v818, %v814
    %v975 = vpack.c.b16 %v819, %v815
    %v976 = vpack.c.b16 %v820, %v816
    %v977 = vpack.c.b16 %v825, %v821
    %v978 = vpack.c.b16 %v826, %v822
    %v979 = vpack.c.b16 %v827, %v823
    %v980 = vpack.c.b16 %v828, %v824
    %v981 = vpack.c.b16 %v833, %v829
    %v982 = vpack.c.b16 %v834, %v830
    %v983 = vpack.c.b16 %v835, %v831
    %v984 = vpack.c.b16 %v836, %v832
    %v985 = vpack.c.b16 %v841, %v837
    %v986 = vpack.c.b16 %v842, %v838
    %v987 = vpack.c.b16 %v843, %v839
    %v988 = vpack.c.b16 %v844, %v840
    %v989 = vpack.c.b16 %v849, %v845
    %v990 = vpack.c.b16 %v850, %v846
    %v991 = vpack.c.b16 %v851, %v847
    %v992 = vpack.c.b16 %v852, %v848
    %v993 = vpack.c.b16 %v857, %v853
    %v994 = vpack.c.b16 %v858, %v854
    %v995 = vpack.c.b16 %v859, %v855
    %v996 = vpack.c.b16 %v860, %v856
    %v997 = vpack.c.b16 %v865, %v861
    %v998 = vpack.c.b16 %v866, %v862
    %v999 = vpack.c.b16 %v867, %v863
    %v1000 = vpack.c.b16 %v868, %v864
    %v1001 = vpack.c.b16 %v873, %v869
    %v1002 = vpack.c.b16 %v874, %v870
    %v1003 = vpack.c.b16 %v875, %v871
    %v1004 = vpack.c.b16 %v876, %v872
    %1133 = vmatprep.subr.bf16.mxu0 %v906
    %1134 = vmatpush1.bf16.msra.mxu0 %v905
    %1135 = vmatprep.subr.bf16.mxu0 %v902
    %1136 = vmatpush1.bf16.msra.mxu0 %v901
    %1137 = vmatprep.subr.bf16.mxu0 %v898
    %1138 = vmatpush1.bf16.msra.mxu0 %v897
    %1139 = vmatprep.subr.bf16.mxu0 %v894
    %1140 = vmatpush1.bf16.msra.mxu0 %v893
    %1141 = vmatprep.subr.bf16.mxu0 %v890
    %1142 = vmatpush1.bf16.msra.mxu0 %v889
    %1143 = vmatprep.subr.bf16.mxu0 %v886
    %1144 = vmatpush1.bf16.msra.mxu0 %v885
    %1145 = vmatprep.subr.bf16.mxu0 %v882
    %1146 = vmatpush1.bf16.msra.mxu0 %v881
    %1147 = vmatprep.subr.bf16.mxu0 %v878
    %1148 = vmatpush1.bf16.msra.mxu0 %v877
    %1149 = vmatprep.subr.bf16.mxu0 %v938
    %1150 = vmatpush2.bf16.msra.mxu0 %v937
    %1151 = vmatprep.subr.bf16.mxu0 %v934
    %1152 = vmatpush2.bf16.msra.mxu0 %v933
    %1153 = vmatprep.subr.bf16.mxu0 %v930
    %1154 = vmatpush2.bf16.msra.mxu0 %v929
    %1155 = vmatprep.subr.bf16.mxu0 %v926
    %1156 = vmatpush2.bf16.msra.mxu0 %v925
    %1157 = vmatprep.subr.bf16.mxu0 %v922
    %1158 = vmatpush2.bf16.msra.mxu0 %v921
    %1159 = vmatprep.subr.bf16.mxu0 %v918
    %1160 = vmatpush2.bf16.msra.mxu0 %v917
    %1161 = vmatprep.subr.bf16.mxu0 %v914
    %1162 = vmatpush2.bf16.msra.mxu0 %v913
    %1163 = vmatprep.subr.bf16.mxu0 %v910
    %1164 = vmatpush2.bf16.msra.mxu0 %v909
    %1165 = vmatprep.mubr.bf16.mxu0 %v340
    %1166 = vmatmul.mubr.bf16.gmra.mxu0 %v339
    %v1167 = vpop.f32.mrf.mxu0
    %v1168 = vadd.f32 %v476, %v1167
    %v1169 = vpop.f32.mrf.mxu0
    %v1170 = vadd.f32 %v480, %v1169
    %v1171 = vpop.f32.mrf.mxu0
    %v1172 = vadd.f32 %v476, %v1171
    %v1173 = vpop.f32.mrf.mxu0
    %v1174 = vadd.f32 %v480, %v1173
    %1175 = vdwg.mxu0
    %1176 = vmatprep.subr.bf16.mxu0 %v970
    %1177 = vmatpush1.bf16.msra.mxu0 %v969
    %1178 = vmatprep.subr.bf16.mxu0 %v966
    %1179 = vmatpush1.bf16.msra.mxu0 %v965
    %1180 = vmatprep.subr.bf16.mxu0 %v962
    %1181 = vmatpush1.bf16.msra.mxu0 %v961
    %1182 = vmatprep.subr.bf16.mxu0 %v958
    %1183 = vmatpush1.bf16.msra.mxu0 %v957
    %1184 = vmatprep.subr.bf16.mxu0 %v954
    %1185 = vmatpush1.bf16.msra.mxu0 %v953
    %1186 = vmatprep.subr.bf16.mxu0 %v950
    %1187 = vmatpush1.bf16.msra.mxu0 %v949
    %1188 = vmatprep.subr.bf16.mxu0 %v946
    %1189 = vmatpush1.bf16.msra.mxu0 %v945
    %1190 = vmatprep.subr.bf16.mxu0 %v942
    %1191 = vmatpush1.bf16.msra.mxu0 %v941
    %1192 = vmatprep.subr.bf16.mxu0 %v1002
    %1193 = vmatpush2.bf16.msra.mxu0 %v1001
    %1194 = vmatprep.subr.bf16.mxu0 %v998
    %1195 = vmatpush2.bf16.msra.mxu0 %v997
    %1196 = vmatprep.subr.bf16.mxu0 %v994
    %1197 = vmatpush2.bf16.msra.mxu0 %v993
    %1198 = vmatprep.subr.bf16.mxu0 %v990
    %1199 = vmatpush2.bf16.msra.mxu0 %v989
    %1200 = vmatprep.subr.bf16.mxu0 %v986
    %1201 = vmatpush2.bf16.msra.mxu0 %v985
    %1202 = vmatprep.subr.bf16.mxu0 %v982
    %1203 = vmatpush2.bf16.msra.mxu0 %v981
    %1204 = vmatprep.subr.bf16.mxu0 %v978
    %1205 = vmatpush2.bf16.msra.mxu0 %v977
    %1206 = vmatprep.subr.bf16.mxu0 %v974
    %1207 = vmatpush2.bf16.msra.mxu0 %v973
    %1208 = vmatprep.mubr.bf16.mxu0 %v342
    %1209 = vmatmul.mubr.bf16.gmra.mxu0 %v341
    %v1210 = vpop.f32.mrf.mxu0
    %v1211 = vadd.f32 %v1168, %v1210
    %v1212 = vpop.f32.mrf.mxu0
    %v1213 = vadd.f32 %v1170, %v1212
    %v1214 = vpop.f32.mrf.mxu0
    %v1215 = vadd.f32 %v1172, %v1214
    %v1216 = vpop.f32.mrf.mxu0
    %v1217 = vadd.f32 %v1174, %v1216
    %1218 = vdwg.mxu0
    %1219 = vmatprep.subr.bf16.mxu0 %v908
    %1220 = vmatpush1.bf16.msra.mxu0 %v907
    %1221 = vmatprep.subr.bf16.mxu0 %v904
    %1222 = vmatpush1.bf16.msra.mxu0 %v903
    %1223 = vmatprep.subr.bf16.mxu0 %v900
    %1224 = vmatpush1.bf16.msra.mxu0 %v899
    %1225 = vmatprep.subr.bf16.mxu0 %v896
    %1226 = vmatpush1.bf16.msra.mxu0 %v895
    %1227 = vmatprep.subr.bf16.mxu0 %v892
    %1228 = vmatpush1.bf16.msra.mxu0 %v891
    %1229 = vmatprep.subr.bf16.mxu0 %v888
    %1230 = vmatpush1.bf16.msra.mxu0 %v887
    %1231 = vmatprep.subr.bf16.mxu0 %v884
    %1232 = vmatpush1.bf16.msra.mxu0 %v883
    %1233 = vmatprep.subr.bf16.mxu0 %v880
    %1234 = vmatpush1.bf16.msra.mxu0 %v879
    %1235 = vmatprep.subr.bf16.mxu0 %v940
    %1236 = vmatpush2.bf16.msra.mxu0 %v939
    %1237 = vmatprep.subr.bf16.mxu0 %v936
    %1238 = vmatpush2.bf16.msra.mxu0 %v935
    %1239 = vmatprep.subr.bf16.mxu0 %v932
    %1240 = vmatpush2.bf16.msra.mxu0 %v931
    %1241 = vmatprep.subr.bf16.mxu0 %v928
    %1242 = vmatpush2.bf16.msra.mxu0 %v927
    %1243 = vmatprep.subr.bf16.mxu0 %v924
    %1244 = vmatpush2.bf16.msra.mxu0 %v923
    %1245 = vmatprep.subr.bf16.mxu0 %v920
    %1246 = vmatpush2.bf16.msra.mxu0 %v919
    %1247 = vmatprep.subr.bf16.mxu0 %v916
    %1248 = vmatpush2.bf16.msra.mxu0 %v915
    %1249 = vmatprep.subr.bf16.mxu0 %v912
    %1250 = vmatpush2.bf16.msra.mxu0 %v911
    %1251 = vmatprep.mubr.bf16.mxu0 %v340
    %1252 = vmatmul.mubr.bf16.gmra.mxu0 %v339
    %v1253 = vpop.f32.mrf.mxu0
    %v1254 = vadd.f32 %v484, %v1253
    %v1255 = vpop.f32.mrf.mxu0
    %v1256 = vadd.f32 %v488, %v1255
    %v1257 = vpop.f32.mrf.mxu0
    %v1258 = vadd.f32 %v484, %v1257
    %v1259 = vpop.f32.mrf.mxu0
    %v1260 = vadd.f32 %v488, %v1259
    %1261 = vdwg.mxu0
    %1262 = vmatprep.subr.bf16.mxu0 %v972
    %1263 = vmatpush1.bf16.msra.mxu0 %v971
    %1264 = vmatprep.subr.bf16.mxu0 %v968
    %1265 = vmatpush1.bf16.msra.mxu0 %v967
    %1266 = vmatprep.subr.bf16.mxu0 %v964
    %1267 = vmatpush1.bf16.msra.mxu0 %v963
    %1268 = vmatprep.subr.bf16.mxu0 %v960
    %1269 = vmatpush1.bf16.msra.mxu0 %v959
    %1270 = vmatprep.subr.bf16.mxu0 %v956
    %1271 = vmatpush1.bf16.msra.mxu0 %v955
    %1272 = vmatprep.subr.bf16.mxu0 %v952
    %1273 = vmatpush1.bf16.msra.mxu0 %v951
    %1274 = vmatprep.subr.bf16.mxu0 %v948
    %1275 = vmatpush1.bf16.msra.mxu0 %v947
    %1276 = vmatprep.subr.bf16.mxu0 %v944
    %1277 = vmatpush1.bf16.msra.mxu0 %v943
    %1278 = vmatprep.subr.bf16.mxu0 %v1004
    %1279 = vmatpush2.bf16.msra.mxu0 %v1003
    %1280 = vmatprep.subr.bf16.mxu0 %v1000
    %1281 = vmatpush2.bf16.msra.mxu0 %v999
    %1282 = vmatprep.subr.bf16.mxu0 %v996
    %1283 = vmatpush2.bf16.msra.mxu0 %v995
    %1284 = vmatprep.subr.bf16.mxu0 %v992
    %1285 = vmatpush2.bf16.msra.mxu0 %v991
    %1286 = vmatprep.subr.bf16.mxu0 %v988
    %1287 = vmatpush2.bf16.msra.mxu0 %v987
    %1288 = vmatprep.subr.bf16.mxu0 %v984
    %1289 = vmatpush2.bf16.msra.mxu0 %v983
    %1290 = vmatprep.subr.bf16.mxu0 %v980
    %1291 = vmatpush2.bf16.msra.mxu0 %v979
    %1292 = vmatprep.subr.bf16.mxu0 %v976
    %1293 = vmatpush2.bf16.msra.mxu0 %v975
    %1294 = vmatprep.mubr.bf16.mxu0 %v342
    %1295 = vmatmul.mubr.bf16.gmra.mxu0 %v341
    %v1296 = vpop.f32.mrf.mxu0
    %v1297 = vadd.f32 %v1254, %v1296
    %v1298 = vpop.f32.mrf.mxu0
    %v1299 = vadd.f32 %v1256, %v1298
    %v1300 = vpop.f32.mrf.mxu0
    %v1301 = vadd.f32 %v1258, %v1300
    %v1302 = vpop.f32.mrf.mxu0
    %v1303 = vadd.f32 %v1260, %v1302
    %1304 = vdwg.mxu0
    %v1305 = vmax.f32 %v1211, 0.0
    %v1306 = vmax.f32 %v1213, 0.0
    %v1307 = vmax.f32 %v1297, 0.0
    %v1308 = vmax.f32 %v1299, 0.0
    %v1309 = vmax.f32 %v1215, 0.0
    %v1310 = vmax.f32 %v1217, 0.0
    %v1311 = vmax.f32 %v1301, 0.0
    %v1312 = vmax.f32 %v1303, 0.0
    %v1313 = vpack.c.bf16 %v1309, %v1305
    %v1314 = vpack.c.bf16 %v1310, %v1306
    %v1315 = vpack.c.bf16 %v1311, %v1307
    %v1316 = vpack.c.bf16 %v1312, %v1308
    %v1317 = vld [vmem:[%s5] sm:$0xf]
    %v1318 = vld [vmem:[%s5 + $0x4] sm:$0xf]
    %v1319 = vld [vmem:[%s5 + $0x8] sm:$0xf]
    %v1320 = vld [vmem:[%s5 + $0xc] sm:$0xf]
    %v1321 = vld [vmem:[%s5 + $0x10] sm:$0xf]
    %v1322 = vld [vmem:[%s5 + $0x14] sm:$0xf]
    %v1323 = vld [vmem:[%s5 + $0x18] sm:$0xf]
    %v1324 = vld [vmem:[%s5 + $0x1c] sm:$0xf]
    %v1325 = vld [vmem:[%s5 + $0x20] sm:$0xf]
    %v1326 = vld [vmem:[%s5 + $0x24] sm:$0xf]
    %v1327 = vld [vmem:[%s5 + $0x28] sm:$0xf]
    %v1328 = vld [vmem:[%s5 + $0x2c] sm:$0xf]
    %v1329 = vld [vmem:[%s5 + $0x30] sm:$0xf]
    %v1330 = vld [vmem:[%s5 + $0x34] sm:$0xf]
    %v1331 = vld [vmem:[%s5 + $0x38] sm:$0xf]
    %v1332 = vld [vmem:[%s5 + $0x3c] sm:$0xf]
    %v1333 = vld [vmem:[%s5 + $0x40] sm:$0xf]
    %v1334 = vld [vmem:[%s5 + $0x44] sm:$0xf]
    %v1335 = vld [vmem:[%s5 + $0x48] sm:$0xf]
    %v1336 = vld [vmem:[%s5 + $0x4c] sm:$0xf]
    %v1337 = vld [vmem:[%s5 + $0x50] sm:$0xf]
    %v1338 = vld [vmem:[%s5 + $0x54] sm:$0xf]
    %v1339 = vld [vmem:[%s5 + $0x58] sm:$0xf]
    %v1340 = vld [vmem:[%s5 + $0x5c] sm:$0xf]
    %v1341 = vld [vmem:[%s5 + $0x60] sm:$0xf]
    %v1342 = vld [vmem:[%s5 + $0x64] sm:$0xf]
    %v1343 = vld [vmem:[%s5 + $0x68] sm:$0xf]
    %v1344 = vld [vmem:[%s5 + $0x6c] sm:$0xf]
    %v1345 = vld [vmem:[%s5 + $0x70] sm:$0xf]
    %v1346 = vld [vmem:[%s5 + $0x74] sm:$0xf]
    %v1347 = vld [vmem:[%s5 + $0x78] sm:$0xf]
    %v1348 = vld [vmem:[%s5 + $0x7c] sm:$0xf]
    %v1349 = vld [vmem:[%s5 + $0x80] sm:$0xf]
    %v1350 = vld [vmem:[%s5 + $0x84] sm:$0xf]
    %v1351 = vld [vmem:[%s5 + $0x88] sm:$0xf]
    %v1352 = vld [vmem:[%s5 + $0x8c] sm:$0xf]
    %v1353 = vld [vmem:[%s5 + $0x90] sm:$0xf]
    %v1354 = vld [vmem:[%s5 + $0x94] sm:$0xf]
    %v1355 = vld [vmem:[%s5 + $0x98] sm:$0xf]
    %v1356 = vld [vmem:[%s5 + $0x9c] sm:$0xf]
    %v1357 = vld [vmem:[%s5 + $0xa0] sm:$0xf]
    %v1358 = vld [vmem:[%s5 + $0xa4] sm:$0xf]
    %v1359 = vld [vmem:[%s5 + $0xa8] sm:$0xf]
    %v1360 = vld [vmem:[%s5 + $0xac] sm:$0xf]
    %v1361 = vld [vmem:[%s5 + $0xb0] sm:$0xf]
    %v1362 = vld [vmem:[%s5 + $0xb4] sm:$0xf]
    %v1363 = vld [vmem:[%s5 + $0xb8] sm:$0xf]
    %v1364 = vld [vmem:[%s5 + $0xbc] sm:$0xf]
    %v1365 = vld [vmem:[%s5 + $0xc0] sm:$0xf]
    %v1366 = vld [vmem:[%s5 + $0xc4] sm:$0xf]
    %v1367 = vld [vmem:[%s5 + $0xc8] sm:$0xf]
    %v1368 = vld [vmem:[%s5 + $0xcc] sm:$0xf]
    %v1369 = vld [vmem:[%s5 + $0xd0] sm:$0xf]
    %v1370 = vld [vmem:[%s5 + $0xd4] sm:$0xf]
    %v1371 = vld [vmem:[%s5 + $0xd8] sm:$0xf]
    %v1372 = vld [vmem:[%s5 + $0xdc] sm:$0xf]
    %v1373 = vld [vmem:[%s5 + $0xe0] sm:$0xf]
    %v1374 = vld [vmem:[%s5 + $0xe4] sm:$0xf]
    %v1375 = vld [vmem:[%s5 + $0xe8] sm:$0xf]
    %v1376 = vld [vmem:[%s5 + $0xec] sm:$0xf]
    %v1377 = vld [vmem:[%s5 + $0xf0] sm:$0xf]
    %v1378 = vld [vmem:[%s5 + $0xf4] sm:$0xf]
    %v1379 = vld [vmem:[%s5 + $0xf8] sm:$0xf]
    %v1380 = vld [vmem:[%s5 + $0xfc] sm:$0xf]
    %v1381 = vld [vmem:[%s6] sm:$0x1]
    %v1383 = vlaneseq
    %v1384 = vshrl.u32 %v1383, 7
    %v1385 = vsub.s32 0, %v1384
    %v1386 = vrot.slane %v1381, %v1385
    %v1452 = vunpack.c.l.b16 %v1317
    %v1453 = vunpack.c.l.b16 %v1318
    %v1454 = vunpack.c.l.b16 %v1319
    %v1455 = vunpack.c.l.b16 %v1320
    %v1456 = vunpack.c.l.b16 %v1321
    %v1457 = vunpack.c.l.b16 %v1322
    %v1458 = vunpack.c.l.b16 %v1323
    %v1459 = vunpack.c.l.b16 %v1324
    %v1460 = vunpack.c.l.b16 %v1325
    %v1461 = vunpack.c.l.b16 %v1326
    %v1462 = vunpack.c.l.b16 %v1327
    %v1463 = vunpack.c.l.b16 %v1328
    %v1464 = vunpack.c.l.b16 %v1329
    %v1465 = vunpack.c.l.b16 %v1330
    %v1466 = vunpack.c.l.b16 %v1331
    %v1467 = vunpack.c.l.b16 %v1332
    %v1468 = vunpack.c.l.b16 %v1333
    %v1469 = vunpack.c.l.b16 %v1334
    %v1470 = vunpack.c.l.b16 %v1335
    %v1471 = vunpack.c.l.b16 %v1336
    %v1472 = vunpack.c.l.b16 %v1337
    %v1473 = vunpack.c.l.b16 %v1338
    %v1474 = vunpack.c.l.b16 %v1339
    %v1475 = vunpack.c.l.b16 %v1340
    %v1476 = vunpack.c.l.b16 %v1341
    %v1477 = vunpack.c.l.b16 %v1342
    %v1478 = vunpack.c.l.b16 %v1343
    %v1479 = vunpack.c.l.b16 %v1344
    %v1480 = vunpack.c.l.b16 %v1345
    %v1481 = vunpack.c.l.b16 %v1346
    %v1482 = vunpack.c.l.b16 %v1347
    %v1483 = vunpack.c.l.b16 %v1348
    %v1484 = vunpack.c.l.b16 %v1349
    %v1485 = vunpack.c.l.b16 %v1350
    %v1486 = vunpack.c.l.b16 %v1351
    %v1487 = vunpack.c.l.b16 %v1352
    %v1488 = vunpack.c.l.b16 %v1353
    %v1489 = vunpack.c.l.b16 %v1354
    %v1490 = vunpack.c.l.b16 %v1355
    %v1491 = vunpack.c.l.b16 %v1356
    %v1492 = vunpack.c.l.b16 %v1357
    %v1493 = vunpack.c.l.b16 %v1358
    %v1494 = vunpack.c.l.b16 %v1359
    %v1495 = vunpack.c.l.b16 %v1360
    %v1496 = vunpack.c.l.b16 %v1361
    %v1497 = vunpack.c.l.b16 %v1362
    %v1498 = vunpack.c.l.b16 %v1363
    %v1499 = vunpack.c.l.b16 %v1364
    %v1500 = vunpack.c.l.b16 %v1365
    %v1501 = vunpack.c.l.b16 %v1366
    %v1502 = vunpack.c.l.b16 %v1367
    %v1503 = vunpack.c.l.b16 %v1368
    %v1504 = vunpack.c.l.b16 %v1369
    %v1505 = vunpack.c.l.b16 %v1370
    %v1506 = vunpack.c.l.b16 %v1371
    %v1507 = vunpack.c.l.b16 %v1372
    %v1508 = vunpack.c.l.b16 %v1373
    %v1509 = vunpack.c.l.b16 %v1374
    %v1510 = vunpack.c.l.b16 %v1375
    %v1511 = vunpack.c.l.b16 %v1376
    %v1512 = vunpack.c.l.b16 %v1377
    %v1513 = vunpack.c.l.b16 %v1378
    %v1514 = vunpack.c.l.b16 %v1379
    %v1515 = vunpack.c.l.b16 %v1380
    %v1516 = vpack.c.b16 %v1453, %v1452
    %v1517 = vpack.c.b16 %v1455, %v1454
    %v1518 = vpack.c.b16 %v1457, %v1456
    %v1519 = vpack.c.b16 %v1459, %v1458
    %v1520 = vpack.c.b16 %v1461, %v1460
    %v1521 = vpack.c.b16 %v1463, %v1462
    %v1522 = vpack.c.b16 %v1465, %v1464
    %v1523 = vpack.c.b16 %v1467, %v1466
    %v1524 = vpack.c.b16 %v1469, %v1468
    %v1525 = vpack.c.b16 %v1471, %v1470
    %v1526 = vpack.c.b16 %v1473, %v1472
    %v1527 = vpack.c.b16 %v1475, %v1474
    %v1528 = vpack.c.b16 %v1477, %v1476
    %v1529 = vpack.c.b16 %v1479, %v1478
    %v1530 = vpack.c.b16 %v1481, %v1480
    %v1531 = vpack.c.b16 %v1483, %v1482
    %v1532 = vpack.c.b16 %v1485, %v1484
    %v1533 = vpack.c.b16 %v1487, %v1486
    %v1534 = vpack.c.b16 %v1489, %v1488
    %v1535 = vpack.c.b16 %v1491, %v1490
    %v1536 = vpack.c.b16 %v1493, %v1492
    %v1537 = vpack.c.b16 %v1495, %v1494
    %v1538 = vpack.c.b16 %v1497, %v1496
    %v1539 = vpack.c.b16 %v1499, %v1498
    %v1540 = vpack.c.b16 %v1501, %v1500
    %v1541 = vpack.c.b16 %v1503, %v1502
    %v1542 = vpack.c.b16 %v1505, %v1504
    %v1543 = vpack.c.b16 %v1507, %v1506
    %v1544 = vpack.c.b16 %v1509, %v1508
    %v1545 = vpack.c.b16 %v1511, %v1510
    %v1546 = vpack.c.b16 %v1513, %v1512
    %v1547 = vpack.c.b16 %v1515, %v1514
    %1580 = vmatprep.subr.bf16.mxu0 0
    %1581 = vmatpush1.bf16.msra.mxu0 %v1523
    %1582 = vmatprep.subr.bf16.mxu0 0
    %1583 = vmatpush1.bf16.msra.mxu0 %v1522
    %1584 = vmatprep.subr.bf16.mxu0 0
    %1585 = vmatpush1.bf16.msra.mxu0 %v1521
    %1586 = vmatprep.subr.bf16.mxu0 0
    %1587 = vmatpush1.bf16.msra.mxu0 %v1520
    %1588 = vmatprep.subr.bf16.mxu0 0
    %1589 = vmatpush1.bf16.msra.mxu0 %v1519
    %1590 = vmatprep.subr.bf16.mxu0 0
    %1591 = vmatpush1.bf16.msra.mxu0 %v1518
    %1592 = vmatprep.subr.bf16.mxu0 0
    %1593 = vmatpush1.bf16.msra.mxu0 %v1517
    %1594 = vmatprep.subr.bf16.mxu0 0
    %1595 = vmatpush1.bf16.msra.mxu0 %v1516
    %1596 = vmatprep.subr.bf16.mxu0 0
    %1597 = vmatpush2.bf16.msra.mxu0 %v1531
    %1598 = vmatprep.subr.bf16.mxu0 0
    %1599 = vmatpush2.bf16.msra.mxu0 %v1530
    %1600 = vmatprep.subr.bf16.mxu0 0
    %1601 = vmatpush2.bf16.msra.mxu0 %v1529
    %1602 = vmatprep.subr.bf16.mxu0 0
    %1603 = vmatpush2.bf16.msra.mxu0 %v1528
    %1604 = vmatprep.subr.bf16.mxu0 0
    %1605 = vmatpush2.bf16.msra.mxu0 %v1527
    %1606 = vmatprep.subr.bf16.mxu0 0
    %1607 = vmatpush2.bf16.msra.mxu0 %v1526
    %1608 = vmatprep.subr.bf16.mxu0 0
    %1609 = vmatpush2.bf16.msra.mxu0 %v1525
    %1610 = vmatprep.subr.bf16.mxu0 0
    %1611 = vmatpush2.bf16.msra.mxu0 %v1524
    %1612 = vmatprep.mubr.bf16.mxu0 %v1314
    %1613 = vmatmul.mubr.bf16.gmra.mxu0 %v1313
    %v1614 = vpop.f32.mrf.mxu0
    %v1615 = vadd.f32 %v1386, %v1614
    %v1616 = vpop.f32.mrf.mxu0
    %v1617 = vpop.f32.mrf.mxu0
    %v1618 = vadd.f32 %v1386, %v1617
    %v1619 = vpop.f32.mrf.mxu0
    %1620 = vdwg.mxu0
    %1621 = vmatprep.subr.bf16.mxu0 0
    %1622 = vmatpush1.bf16.msra.mxu0 %v1539
    %1623 = vmatprep.subr.bf16.mxu0 0
    %1624 = vmatpush1.bf16.msra.mxu0 %v1538
    %1625 = vmatprep.subr.bf16.mxu0 0
    %1626 = vmatpush1.bf16.msra.mxu0 %v1537
    %1627 = vmatprep.subr.bf16.mxu0 0
    %1628 = vmatpush1.bf16.msra.mxu0 %v1536
    %1629 = vmatprep.subr.bf16.mxu0 0
    %1630 = vmatpush1.bf16.msra.mxu0 %v1535
    %1631 = vmatprep.subr.bf16.mxu0 0
    %1632 = vmatpush1.bf16.msra.mxu0 %v1534
    %1633 = vmatprep.subr.bf16.mxu0 0
    %1634 = vmatpush1.bf16.msra.mxu0 %v1533
    %1635 = vmatprep.subr.bf16.mxu0 0
    %1636 = vmatpush1.bf16.msra.mxu0 %v1532
    %1637 = vmatprep.subr.bf16.mxu0 0
    %1638 = vmatpush2.bf16.msra.mxu0 %v1547
    %1639 = vmatprep.subr.bf16.mxu0 0
    %1640 = vmatpush2.bf16.msra.mxu0 %v1546
    %1641 = vmatprep.subr.bf16.mxu0 0
    %1642 = vmatpush2.bf16.msra.mxu0 %v1545
    %1643 = vmatprep.subr.bf16.mxu0 0
    %1644 = vmatpush2.bf16.msra.mxu0 %v1544
    %1645 = vmatprep.subr.bf16.mxu0 0
    %1646 = vmatpush2.bf16.msra.mxu0 %v1543
    %1647 = vmatprep.subr.bf16.mxu0 0
    %1648 = vmatpush2.bf16.msra.mxu0 %v1542
    %1649 = vmatprep.subr.bf16.mxu0 0
    %1650 = vmatpush2.bf16.msra.mxu0 %v1541
    %1651 = vmatprep.subr.bf16.mxu0 0
    %1652 = vmatpush2.bf16.msra.mxu0 %v1540
    %1653 = vmatprep.mubr.bf16.mxu0 %v1316
    %1654 = vmatmul.mubr.bf16.gmra.mxu0 %v1315
    %v1655 = vpop.f32.mrf.mxu0
    %v1656 = vadd.f32 %v1615, %v1655
    %v1657 = vpop.f32.mrf.mxu0
    %v1658 = vpop.f32.mrf.mxu0
    %v1659 = vadd.f32 %v1618, %v1658
    %v1660 = vpop.f32.mrf.mxu0
    %1661 = vdwg.mxu0
    %1662 = vst [vmem:[#allocation2] sm:$0xff] %v1656
    %1663 = vst [vmem:[#allocation2 + $0x8] sm:$0xff] %v1659
    // Predicated region
    $region30: #{mlp_forward.1} parent=1 // pred_check
      _
    $region31: #{mlp_forward.1} parent=1 // pred_check_branch
      %1665 = sbr.rel (0) target = $region33
    $region32: #{mlp_forward.1} parent=1 // pred_region
      %s1667 = ssub.s32 256, 256
      %1668 = vsyncadd [#allocation3], %s1667
      %s1669 = sshll.u32 [#allocation2], 4
      %s1670 = int_to_ptr.vmem [resolvable:$true] %s1669
      %1675 = dma.vmem_to_hbm [thread:$0]  %s1670, 256, %s7, [#allocation3], 128, 128, 8
    $region33: #{mlp_forward.1} parent=1 // pred_fallthru
      _
    // Predicated region
    $region34: #{mlp_forward.1} parent=1 // pred_check
      _
    $region35: #{mlp_forward.1} parent=1 // pred_check_branch
      %1677 = sbr.rel (0) target = $region37
    $region36: #{mlp_forward.1} parent=1 // pred_region
      %1678 = dma.done [#allocation3], 256
    $region37: #{mlp_forward.1} parent=1 // pred_fallthru
      _
    %1679 = vsyncpa [#allocation3], 1

</llo_original>
